<compile_context>
chip_gen: v5e
topology: v5e:2x2
jax: 0.10.0
libtpu: 0.0.40
codegen_flags: <defaults>
</compile_context>

<pallas_src>
import functools

import numpy as np

import jax
import jax.numpy as jnp
from jax.experimental import pallas as pl
from jax.experimental.pallas import tpu as pltpu


def _attn_tile_kernel(mem_ref, q_ref, wk_ref, wv_ref, wq_ref, hs_ref, o_ref,
                      *, tb, m, f, scaling):
    """One batch tile: tb batches x m memory slots, feature width f.

    mem_ref : (tb*m, f)  memory rows (mxu dtype, e.g. bf16)
    q_ref   : (tb, f)    query rows  (mxu dtype)
    wk/wv/wq: (f, f)     W^T slices of nn.Linear(F, 3F) (mxu dtype)
    hs_ref  : (f, f)     f32 same-head indicator (grid-invariant, resident)
    o_ref   : (tb, 4f)   f32 [num | den | vsum | tile_max] lane-dense slab
    """
    mem = mem_ref[...]
    # Projection: memories only need k, v; queries only need q.  No zero
    # blocks, no per-edge q recompute.  f32 accumulation on the MXU.
    k = jnp.dot(mem, wk_ref[...], preferred_element_type=jnp.float32)        # (tb*m, f)
    v = jnp.dot(mem, wv_ref[...], preferred_element_type=jnp.float32)        # (tb*m, f)
    q = jnp.dot(q_ref[...], wq_ref[...], preferred_element_type=jnp.float32) # (tb, f)
    q = q * scaling  # scale in f32 (matches torch: q = q * Fh**-0.5)

    # Broadcast each batch's query across its m memory rows.  m % 8 == 0 keeps
    # the (tb, m, f) <-> (tb*m, f) views layout-preserving (no VMEM copies).
    q_e = jnp.broadcast_to(q.reshape(tb, 1, f), (tb, m, f)).reshape(tb * m, f)

    # Per-edge per-head logits, replicated across each head's fh lanes, via a
    # single small MXU dot against the (resident) same-head indicator.
    logits = jnp.dot(q_e * k, hs_ref[...], preferred_element_type=jnp.float32)

    # Per-tile per-head max; the exact global-max correction of
    # scatter_softmax happens in the (tiny) wrapper finalize.
    tmax = jnp.max(logits, axis=0, keepdims=True)             # (1, f)
    e = jnp.exp(logits - tmax)                                # (tb*m, f)

    # Per-batch reductions over the m memory slots: sublane reductions on the
    # (tb, m, f) view -- no O(tb^2 * m) selector matmuls or selector VMEM.
    e3 = e.reshape(tb, m, f)
    v3 = v.reshape(tb, m, f)
    num = jnp.sum(e3 * v3, axis=1)                            # (tb, f)
    den = jnp.sum(e3, axis=1)                                 # (tb, f)
    vsum = jnp.sum(v3, axis=1)                                # (tb, f)
    tmax_b = jnp.broadcast_to(tmax, (tb, f))                  # (tb, f)

    # Single lane-dense store (4f lanes == 128 for f=32) instead of several
    # narrow masked partial stores.
    o_ref[...] = jnp.concatenate([num, den, vsum, tmax_b], axis=1)


_VMEM_TILE_BUDGET = 40 * (2 ** 20)  # fits v7x's 64 MiB VMEM/TC with headroom


def _vmem_bytes_estimate(tb, m, f, in_itemsize):
    rows = tb * m
    mem_in = 2 * rows * f * in_itemsize      # double-buffered memory tile
    q_in = 2 * tb * f * in_itemsize          # double-buffered query tile
    weights = 4 * f * f * 4                  # wk, wv, wq, head indicator (resident)
    inter = 6 * rows * f * 4                 # k, v, q_e, logits, e, e*v (f32)
    out = 2 * tb * 4 * f * 4                 # double-buffered output slab
    return mem_in + q_in + weights + inter + out


def _choose_block_b(B, m, f, in_itemsize, block_b=None):
    if block_b is not None:
        assert B % block_b == 0, "block_b must divide B"
        assert block_b == B or block_b % 8 == 0, (
            "block_b must equal B or be a multiple of 8 ((8,128) rule)")
        return block_b
    cands = [d for d in range(1, B + 1)
             if B % d == 0 and (d == B or d % 8 == 0)]
    feasible = [d for d in cands
                if _vmem_bytes_estimate(d, m, f, in_itemsize) <= _VMEM_TILE_BUDGET]
    if not feasible:
        return min(cands)
    multi = [d for d in feasible if B // d >= 2]  # >=2 grid steps: pipelining + v7x dual-TC
    pool = multi if multi else feasible
    big = [d for d in pool if d * m >= 512]       # >=512-row tiles ~ HBM roofline
    return min(big) if big else max(pool)


def query_aggreg(memory, query, w_proj, nheads, *, block_b=None,
                 mxu_dtype=jnp.bfloat16):
    """memory: (B, M, F); query: (B, F); w_proj: (3F, F) as in nn.Linear."""
    B, M, F = memory.shape
    assert query.shape == (B, F)
    assert w_proj.shape == (3 * F, F)
    assert F % nheads == 0
    # In-kernel (tb, M, F) views require M to be a whole number of sublane
    # tiles so reshapes stay layout-preserving.
    assert M % 8 == 0, "M must be a multiple of 8 (regular-case kernel)"
    # TODO(synk): pad/mask path for M not a multiple of 8 is not implemented.

    Fh = F // nheads
    scaling = float(Fh) ** (-0.5)

    # W^T slices (scaling is applied to q in f32 INSIDE the kernel, after the
    # dot, so bf16 weight rounding matches a plain cast of the torch weight).
    wq = w_proj[:F, :].T.astype(mxu_dtype)
    wk = w_proj[F:2 * F, :].T.astype(mxu_dtype)
    wv = w_proj[2 * F:, :].T.astype(mxu_dtype)

    # Grid-invariant same-head indicator, passed as a tiny resident input.
    hid = np.arange(F) // Fh
    head_sum = jnp.asarray((hid[:, None] == hid[None, :]).astype(np.float32))

    # In production the activations are typically already bf16, making these
    # casts no-ops; under the caller's jit they fuse with the producers.
    memflat = memory.reshape(B * M, F).astype(mxu_dtype)
    queryc = query.astype(mxu_dtype)

    in_itemsize = np.dtype(mxu_dtype).itemsize
    tb = _choose_block_b(B, M, F, in_itemsize, block_b)
    est = _vmem_bytes_estimate(tb, M, F, in_itemsize)
    vmem_limit = max(int(1.25 * est), 32 * (2 ** 20))

    kernel = functools.partial(_attn_tile_kernel, tb=tb, m=M, f=F,
                               scaling=scaling)
    packed = pl.pallas_call(
        kernel,
        out_shape=jax.ShapeDtypeStruct((B, 4 * F), jnp.float32),
        grid=(B // tb,),
        in_specs=[
            pl.BlockSpec((tb * M, F), lambda i: (i, 0)),   # memory tiles (stream)
            pl.BlockSpec((tb, F), lambda i: (i, 0)),       # query tiles (stream)
            pl.BlockSpec((F, F), lambda i: (0, 0)),        # Wk^T   (resident)
            pl.BlockSpec((F, F), lambda i: (0, 0)),        # Wv^T   (resident)
            pl.BlockSpec((F, F), lambda i: (0, 0)),        # Wq^T   (resident)
            pl.BlockSpec((F, F), lambda i: (0, 0)),        # head indicator
        ],
        out_specs=pl.BlockSpec((tb, 4 * F), lambda i: (i, 0)),
        compiler_params=pltpu.CompilerParams(
            dimension_semantics=("parallel",),
            vmem_limit_bytes=vmem_limit),
    )(memflat, queryc, wk, wv, wq, head_sum)

    # Exact scatter_softmax finalize (global per-head max + 1e-8), O(B*F):
    #   out = sum_m (exp(l - gmax) + 1e-8) v / sum_m (exp(l - gmax) + 1e-8)
    #       = (exp(tmax - gmax)*num + 1e-8*vsum) / (exp(tmax - gmax)*den + 1e-8*M)
    num = packed[:, 0 * F:1 * F]
    den = packed[:, 1 * F:2 * F]
    vsum = packed[:, 2 * F:3 * F]
    tmax = packed[:, 3 * F:4 * F]
    gmax = jnp.max(tmax, axis=0, keepdims=True)       # global per-head max
    scale = jnp.exp(tmax - gmax)
    out = (scale * num + 1e-8 * vsum) / (scale * den + 1e-8 * M)
    return jnp.squeeze(out)  # matches `.squeeze()` in the module's wrapper


def query_aggreg_ref(memory, query, w_proj, nheads, cast_dtype=None):
    """Pure-JAX reference mirroring the PyTorch module (for verification)."""
    B, M, F = memory.shape
    H = nheads
    Fh = F // H
    scaling = float(Fh) ** (-0.5)
    if cast_dtype is not None:  # mimic bf16 MXU operands, f32 accumulation
        memory = memory.astype(cast_dtype)
        query = query.astype(cast_dtype)
        w_proj = w_proj.astype(cast_dtype)
    q = jnp.dot(query, w_proj[:F].T, preferred_element_type=jnp.float32) * scaling
    k = jnp.dot(memory.reshape(B * M, F), w_proj[F:2 * F].T,
                preferred_element_type=jnp.float32).reshape(B, M, F)
    v = jnp.dot(memory.reshape(B * M, F), w_proj[2 * F:].T,
                preferred_element_type=jnp.float32).reshape(B, M, F)
    qh = q.reshape(B, H, Fh)
    kh = k.reshape(B, M, H, Fh)
    vh = v.reshape(B, M, H, Fh)
    aw = jnp.einsum('bhf,bmhf->bmh', qh, kh)
    gmax = aw.max(axis=(0, 1), keepdims=True)          # global per-head max
    e = jnp.exp(aw - gmax) + 1e-8
    w = e / e.sum(axis=1, keepdims=True)
    out = jnp.einsum('bmh,bmhf->bhf', w, vh).reshape(B, F)
    return jnp.squeeze(out)


if __name__ == "__main__":
    B, M, Fmem, nheads = 2, 8, 32, 4   # 2 batches, 8 memory slots, F=32, 4 heads

    key = jax.random.PRNGKey(0)
    k1, k2, k3 = jax.random.split(key, 3)
    memory = jax.random.normal(k1, (B, M, Fmem), dtype=jnp.float32)
    query = jax.random.normal(k2, (B, Fmem), dtype=jnp.float32)
    # Deterministic init of the nn.Linear(Fmem, 3*Fmem, bias=False) weight.
    w_proj = jax.random.normal(k3, (3 * Fmem, Fmem), dtype=jnp.float32) * (
        1.0 / np.sqrt(Fmem))

    ref_f32 = query_aggreg_ref(memory, query, w_proj, nheads)

    # f32 MXU path: tight check against the pure-JAX reference.
    out_f32 = jax.block_until_ready(
        query_aggreg(memory, query, w_proj, nheads, mxu_dtype=jnp.float32))
    np.testing.assert_allclose(np.asarray(out_f32), np.asarray(ref_f32),
                               rtol=2e-4, atol=2e-4)

    # bf16 MXU default path: compare against a reference whose projection
    # operands are also bf16 (f32 accumulation), so only reduction order and
    # the factored finalize differ.
    out_bf16 = jax.block_until_ready(
        query_aggreg(memory, query, w_proj, nheads))
    ref_bf16 = query_aggreg_ref(memory, query, w_proj, nheads,
                                cast_dtype=jnp.bfloat16)
    np.testing.assert_allclose(np.asarray(out_bf16), np.asarray(ref_bf16),
                               rtol=1e-2, atol=1e-2)
    # Sanity: bf16 path stays close to the f32 reference too.
    np.testing.assert_allclose(np.asarray(out_bf16), np.asarray(ref_f32),
                               rtol=1e-1, atol=1e-1)

    print("KERNEL_OK")
</pallas_src>

<mosaic_0001>
module attributes {stable_mosaic.version = 11 : i64} {
  func.func @_attn_tile_kernel(%arg0: i32, %arg1: memref<16x32xf32, #tpu.memory_space<vmem>>, %arg2: memref<2x32xf32, #tpu.memory_space<vmem>>, %arg3: memref<32x32xf32, #tpu.memory_space<vmem>>, %arg4: memref<32x32xf32, #tpu.memory_space<vmem>>, %arg5: memref<32x32xf32, #tpu.memory_space<vmem>>, %arg6: memref<32x32xf32, #tpu.memory_space<vmem>>, %arg7: memref<2x128xf32, #tpu.memory_space<vmem>>) attributes {dimension_semantics = [#tpu.dimension_semantics<parallel>], iteration_bounds = array<i64: 1>, scalar_prefetch = 0 : i64, scratch_operands = 0 : i64, tpu.core_type = #tpu.core_type<tc>, window_params = [{transform_indices = @transform_0, window_bounds = array<i64: 16, 32>}, {transform_indices = @transform_1, window_bounds = array<i64: 2, 32>}, {pipeline_mode = #tpu.pipeline_mode<synchronous>, transform_indices = @transform_2, window_bounds = array<i64: 32, 32>}, {pipeline_mode = #tpu.pipeline_mode<synchronous>, transform_indices = @transform_3, window_bounds = array<i64: 32, 32>}, {pipeline_mode = #tpu.pipeline_mode<synchronous>, transform_indices = @transform_4, window_bounds = array<i64: 32, 32>}, {pipeline_mode = #tpu.pipeline_mode<synchronous>, transform_indices = @transform_5, window_bounds = array<i64: 32, 32>}, {transform_indices = @transform_6, window_bounds = array<i64: 2, 128>}]} {
    %c0 = arith.constant 0 : index
    %c0_0 = arith.constant 0 : index
    %0 = vector.load %arg1[%c0, %c0_0] : memref<16x32xf32, #tpu.memory_space<vmem>>, vector<16x32xf32>
    %c0_1 = arith.constant 0 : index
    %c0_2 = arith.constant 0 : index
    %1 = vector.load %arg3[%c0_1, %c0_2] : memref<32x32xf32, #tpu.memory_space<vmem>>, vector<32x32xf32>
    %cst = arith.constant dense<0.000000e+00> : vector<16x32xf32>
    %2 = tpu.matmul %0, %1, %cst {dimension_numbers = #tpu.dot_dimension_numbers<[1], [0], [0], [1], [0, 0, 1, 1], [], []>} : vector<16x32xf32>, vector<32x32xf32>, vector<16x32xf32> -> vector<16x32xf32>
    %c0_3 = arith.constant 0 : index
    %c0_4 = arith.constant 0 : index
    %3 = vector.load %arg4[%c0_3, %c0_4] : memref<32x32xf32, #tpu.memory_space<vmem>>, vector<32x32xf32>
    %cst_5 = arith.constant dense<0.000000e+00> : vector<16x32xf32>
    %4 = tpu.matmul %0, %3, %cst_5 {dimension_numbers = #tpu.dot_dimension_numbers<[1], [0], [0], [1], [0, 0, 1, 1], [], []>} : vector<16x32xf32>, vector<32x32xf32>, vector<16x32xf32> -> vector<16x32xf32>
    %c0_6 = arith.constant 0 : index
    %c0_7 = arith.constant 0 : index
    %5 = vector.load %arg2[%c0_6, %c0_7] : memref<2x32xf32, #tpu.memory_space<vmem>>, vector<2x32xf32>
    %c0_8 = arith.constant 0 : index
    %c0_9 = arith.constant 0 : index
    %6 = vector.load %arg5[%c0_8, %c0_9] : memref<32x32xf32, #tpu.memory_space<vmem>>, vector<32x32xf32>
    %cst_10 = arith.constant dense<0.000000e+00> : vector<2x32xf32>
    %7 = tpu.matmul %5, %6, %cst_10 {dimension_numbers = #tpu.dot_dimension_numbers<[1], [0], [0], [1], [0, 0, 1, 1], [], []>} : vector<2x32xf32>, vector<32x32xf32>, vector<2x32xf32> -> vector<2x32xf32>
    %cst_11 = arith.constant 0.353553385 : f32
    %8 = vector.broadcast %cst_11 : f32 to vector<2x32xf32>
    %9 = arith.mulf %7, %8 : vector<2x32xf32>
    %10 = vector.shape_cast %9 : vector<2x32xf32> to vector<2x1x32xf32>
    %11 = vector.shape_cast %10 : vector<2x1x32xf32> to vector<2x1x32xf32>
    %12 = vector.broadcast %11 : vector<2x1x32xf32> to vector<2x8x32xf32>
    %13 = vector.shape_cast %12 : vector<2x8x32xf32> to vector<16x32xf32>
    %14 = arith.mulf %13, %2 : vector<16x32xf32>
    %c0_12 = arith.constant 0 : index
    %c0_13 = arith.constant 0 : index
    %15 = vector.load %arg6[%c0_12, %c0_13] : memref<32x32xf32, #tpu.memory_space<vmem>>, vector<32x32xf32>
    %cst_14 = arith.constant dense<0.000000e+00> : vector<16x32xf32>
    %16 = tpu.matmul %14, %15, %cst_14 {dimension_numbers = #tpu.dot_dimension_numbers<[1], [0], [0], [1], [0, 0, 1, 1], [], []>} : vector<16x32xf32>, vector<32x32xf32>, vector<16x32xf32> -> vector<16x32xf32>
    %cst_15 = arith.constant dense<0xFF800000> : vector<32xf32>
    %17 = vector.multi_reduction <maximumf>, %16, %cst_15 [0] : vector<16x32xf32> to vector<32xf32>
    %18 = vector.shape_cast %17 : vector<32xf32> to vector<1x32xf32>
    %19 = vector.broadcast %18 : vector<1x32xf32> to vector<16x32xf32>
    %20 = arith.subf %16, %19 : vector<16x32xf32>
    %21 = math.exp %20 : vector<16x32xf32>
    %22 = vector.shape_cast %21 : vector<16x32xf32> to vector<2x8x32xf32>
    %23 = vector.shape_cast %4 : vector<16x32xf32> to vector<2x8x32xf32>
    %24 = arith.mulf %22, %23 : vector<2x8x32xf32>
    %cst_16 = arith.constant dense<0.000000e+00> : vector<2x32xf32>
    %25 = vector.multi_reduction <add>, %24, %cst_16 [1] : vector<2x8x32xf32> to vector<2x32xf32>
    %cst_17 = arith.constant dense<0.000000e+00> : vector<2x32xf32>
    %26 = vector.multi_reduction <add>, %22, %cst_17 [1] : vector<2x8x32xf32> to vector<2x32xf32>
    %cst_18 = arith.constant dense<0.000000e+00> : vector<2x32xf32>
    %27 = vector.multi_reduction <add>, %23, %cst_18 [1] : vector<2x8x32xf32> to vector<2x32xf32>
    %28 = vector.shape_cast %18 : vector<1x32xf32> to vector<1x32xf32>
    %29 = vector.broadcast %28 : vector<1x32xf32> to vector<2x32xf32>
    %30 = tpu.concatenate %25, %26, %27, %29 in 1 : vector<2x32xf32>, vector<2x32xf32>, vector<2x32xf32>, vector<2x32xf32> -> vector<2x128xf32>
    %c0_19 = arith.constant 0 : index
    %c0_20 = arith.constant 0 : index
    %31 = vector.load %arg7[%c0_19, %c0_20] : memref<2x128xf32, #tpu.memory_space<vmem>>, vector<2x128xf32>
    tpu.vector_store %arg7[%c0_19, %c0_20], %30 {strides = array<i32>} : memref<2x128xf32, #tpu.memory_space<vmem>>, vector<2x128xf32>,
    return
  }
  func.func @transform_0(%arg0: i32) -> (i32, i32) {
    %c0_i32 = arith.constant 0 : i32
    %c0_i32_0 = arith.constant 0 : i32
    return %arg0, %c0_i32 : i32, i32
  }
  func.func @transform_1(%arg0: i32) -> (i32, i32) {
    %c0_i32 = arith.constant 0 : i32
    %c0_i32_0 = arith.constant 0 : i32
    return %arg0, %c0_i32 : i32, i32
  }
  func.func @transform_2(%arg0: i32) -> (i32, i32) {
    %c0_i32 = arith.constant 0 : i32
    %c0_i32_0 = arith.constant 0 : i32
    %c0_i32_1 = arith.constant 0 : i32
    return %c0_i32, %c0_i32_0 : i32, i32
  }
  func.func @transform_3(%arg0: i32) -> (i32, i32) {
    %c0_i32 = arith.constant 0 : i32
    %c0_i32_0 = arith.constant 0 : i32
    %c0_i32_1 = arith.constant 0 : i32
    return %c0_i32, %c0_i32_0 : i32, i32
  }
  func.func @transform_4(%arg0: i32) -> (i32, i32) {
    %c0_i32 = arith.constant 0 : i32
    %c0_i32_0 = arith.constant 0 : i32
    %c0_i32_1 = arith.constant 0 : i32
    return %c0_i32, %c0_i32_0 : i32, i32
  }
  func.func @transform_5(%arg0: i32) -> (i32, i32) {
    %c0_i32 = arith.constant 0 : i32
    %c0_i32_0 = arith.constant 0 : i32
    %c0_i32_1 = arith.constant 0 : i32
    return %c0_i32, %c0_i32_0 : i32, i32
  }
  func.func @transform_6(%arg0: i32) -> (i32, i32) {
    %c0_i32 = arith.constant 0 : i32
    %c0_i32_0 = arith.constant 0 : i32
    return %arg0, %c0_i32 : i32, i32
  }
}

</mosaic_0001>

<llo_original>
// kernel: tpu_custom_call.1
$region0: #{tpu_custom_call.1}
  #allocation0 [shape = 'u32[]', space=smem, size = 0x4, offset = 0x4, fixed_abs, tag = 'smem constant byte address 0x4 - core index']
  #allocation1 [shape = 'u32[72,128]{1,0:T(1,128)}', space=vmem, size = 0x9000, scoped, tag = 'internal scratch']
  %s0 = inlined_call_operand.hbm [shape: f32[16,32], index: 0, kind: input, shape index: {}]
  %s1 = inlined_call_operand.hbm [shape: f32[2,32], index: 1, kind: input, shape index: {}]
  %s2 = inlined_call_operand.hbm [shape: f32[32,32], index: 2, kind: input, shape index: {}]
  %s3 = inlined_call_operand.hbm [shape: f32[32,32], index: 3, kind: input, shape index: {}]
  %s4 = inlined_call_operand.hbm [shape: f32[32,32], index: 4, kind: input, shape index: {}]
  %s5 = inlined_call_operand.hbm [shape: f32[32,32], index: 5, kind: input, shape index: {}]
  %s6 = inlined_call_operand.hbm [shape: f32[2,128], index: 6, kind: output, shape index: {}]
  %s7 = sld [smem:[#allocation0]]
  $region58: #{tpu_custom_call.1} parent=0
    _
  %s9 = ssub.s32 1, %s7
  %s10 = scalar_select 0, %s9, %s7
  $region1: #{tpu_custom_call.1} parent=0
    #allocation2 [shape = 'u8[8192]{0}', space=vmem, size = 0x2000, scoped, tag = 'input window, operand 0, single buffered']
    #allocation3 [shape = 's32[1]{0}', space=sflag, size = 0x4, scoped, tag = 'scoped memory for tpu_custom_call.1']
    #allocation4 [shape = 's32[1]{0}', space=sflag, size = 0x4, scoped, tag = 'scoped memory for tpu_custom_call.1']
    #allocation5 [shape = 'u8[1024]{0}', space=vmem, size = 0x400, scoped, tag = 'input window, operand 1, single buffered']
    #allocation6 [shape = 's32[1]{0}', space=sflag, size = 0x4, scoped, tag = 'scoped memory for tpu_custom_call.1']
    #allocation7 [shape = 'u8[16384]{0}', space=vmem, size = 0x4000, scoped, tag = 'input window, operand 2, single buffered']
    #allocation8 [shape = 'u8[16384]{0}', space=vmem, size = 0x4000, scoped, tag = 'input window, operand 3, single buffered']
    #allocation9 [shape = 's32[1]{0}', space=sflag, size = 0x4, scoped, tag = 'scoped memory for tpu_custom_call.1']
    #allocation10 [shape = 'u8[16384]{0}', space=vmem, size = 0x4000, scoped, tag = 'input window, operand 4, single buffered']
    #allocation11 [shape = 'u8[16384]{0}', space=vmem, size = 0x4000, scoped, tag = 'input window, operand 5, single buffered']
    #allocation12 [shape = 's32[1]{0}', space=sflag, size = 0x4, scoped, tag = 'scoped memory for tpu_custom_call.1']
    #allocation13 [shape = 'u8[1024]{0}', space=vmem, size = 0x400, scoped, tag = 'output window, operand 0, single buffered']
    %11 = vsyncpa [#allocation3], 0
    %12 = vsyncpa [#allocation6], 0
    %13 = vsyncpa [#allocation9], 0
    %14 = vsyncpa [#allocation12], 0
    %15 = vsyncpa [#allocation4], 0
    // Predicated region
    $region2: #{tpu_custom_call.1} parent=1 // pred_check
      _
    $region3: #{tpu_custom_call.1} parent=1 // pred_check_branch
      %17 = sbr.rel (0) target = $region5
    $region4: #{tpu_custom_call.1} parent=1 // pred_region
      %19 = vsyncadd [#allocation3], 0
      %s20 = sshll.u32 %s0, 4
      %s21 = int_to_ptr.hbm [resolvable:$true] %s20
      %s22 = sshll.u32 [#allocation2], 4
      %s23 = int_to_ptr.vmem [resolvable:$true] %s22
      %28 = dma.hbm_to_vmem [thread:$0]  %s21, 256, %s23, [#allocation3], 128, 128, 8
    $region5: #{tpu_custom_call.1} parent=1 // pred_fallthru
      _
    // Predicated region
    $region6: #{tpu_custom_call.1} parent=1 // pred_check
      _
    $region7: #{tpu_custom_call.1} parent=1 // pred_check_branch
      %30 = sbr.rel (0) target = $region9
    $region8: #{tpu_custom_call.1} parent=1 // pred_region
      %32 = vsyncadd [#allocation6], 0
      %s34 = sshll.u32 %s1, 4
      %s35 = int_to_ptr.hbm [resolvable:$true] %s34
      %s36 = sshll.u32 [#allocation5], 4
      %s37 = int_to_ptr.vmem [resolvable:$true] %s36
      %39 = dma.hbm_to_vmem [thread:$0]  %s35, 32, %s37, [#allocation6]
    $region9: #{tpu_custom_call.1} parent=1 // pred_fallthru
      _
    // Predicated region
    $region10: #{tpu_custom_call.1} parent=1 // pred_check
      _
    $region11: #{tpu_custom_call.1} parent=1 // pred_check_branch
      %41 = sbr.rel (0) target = $region13
    $region12: #{tpu_custom_call.1} parent=1 // pred_region
      %43 = vsyncadd [#allocation6], 0
      %s44 = sshll.u32 %s2, 4
      %s45 = int_to_ptr.hbm [resolvable:$true] %s44
      %s46 = sshll.u32 [#allocation7], 4
      %s47 = int_to_ptr.vmem [resolvable:$true] %s46
      %52 = dma.hbm_to_vmem [thread:$0]  %s45, 512, %s47, [#allocation6], 128, 128, 8
    $region13: #{tpu_custom_call.1} parent=1 // pred_fallthru
      _
    // Predicated region
    $region14: #{tpu_custom_call.1} parent=1 // pred_check
      _
    $region15: #{tpu_custom_call.1} parent=1 // pred_check_branch
      %54 = sbr.rel (0) target = $region17
    $region16: #{tpu_custom_call.1} parent=1 // pred_region
      %56 = vsyncadd [#allocation9], 0
      %s57 = sshll.u32 %s3, 4
      %s58 = int_to_ptr.hbm [resolvable:$true] %s57
      %s59 = sshll.u32 [#allocation8], 4
      %s60 = int_to_ptr.vmem [resolvable:$true] %s59
      %65 = dma.hbm_to_vmem [thread:$0]  %s58, 512, %s60, [#allocation9], 128, 128, 8
    $region17: #{tpu_custom_call.1} parent=1 // pred_fallthru
      _
    // Predicated region
    $region18: #{tpu_custom_call.1} parent=1 // pred_check
      _
    $region19: #{tpu_custom_call.1} parent=1 // pred_check_branch
      %67 = sbr.rel (0) target = $region21
    $region20: #{tpu_custom_call.1} parent=1 // pred_region
      %69 = vsyncadd [#allocation9], 0
      %s70 = sshll.u32 %s4, 4
      %s71 = int_to_ptr.hbm [resolvable:$true] %s70
      %s72 = sshll.u32 [#allocation10], 4
      %s73 = int_to_ptr.vmem [resolvable:$true] %s72
      %78 = dma.hbm_to_vmem [thread:$0]  %s71, 512, %s73, [#allocation9], 128, 128, 8
    $region21: #{tpu_custom_call.1} parent=1 // pred_fallthru
      _
    // Predicated region
    $region22: #{tpu_custom_call.1} parent=1 // pred_check
      _
    $region23: #{tpu_custom_call.1} parent=1 // pred_check_branch
      %80 = sbr.rel (0) target = $region25
    $region24: #{tpu_custom_call.1} parent=1 // pred_region
      %82 = vsyncadd [#allocation12], 0
      %s83 = sshll.u32 %s5, 4
      %s84 = int_to_ptr.hbm [resolvable:$true] %s83
      %s85 = sshll.u32 [#allocation11], 4
      %s86 = int_to_ptr.vmem [resolvable:$true] %s85
      %91 = dma.hbm_to_vmem [thread:$0]  %s84, 512, %s86, [#allocation12], 128, 128, 8
    $region25: #{tpu_custom_call.1} parent=1 // pred_fallthru
      _
    // Predicated region
    $region26: #{tpu_custom_call.1} parent=1 // pred_check
      _
    $region27: #{tpu_custom_call.1} parent=1 // pred_check_branch
      %93 = sbr.rel (0) target = $region29
    $region28: #{tpu_custom_call.1} parent=1 // pred_region
      %95 = dma.done [#allocation3], 256
    $region29: #{tpu_custom_call.1} parent=1 // pred_fallthru
      _
    // Predicated region
    $region30: #{tpu_custom_call.1} parent=1 // pred_check
      _
    $region31: #{tpu_custom_call.1} parent=1 // pred_check_branch
      %97 = sbr.rel (0) target = $region33
    $region32: #{tpu_custom_call.1} parent=1 // pred_region
      %99 = dma.done [#allocation6], 32
    $region33: #{tpu_custom_call.1} parent=1 // pred_fallthru
      _
    // Predicated region
    $region34: #{tpu_custom_call.1} parent=1 // pred_check
      _
    $region35: #{tpu_custom_call.1} parent=1 // pred_check_branch
      %101 = sbr.rel (0) target = $region37
    $region36: #{tpu_custom_call.1} parent=1 // pred_region
      %103 = dma.done [#allocation6], 512
    $region37: #{tpu_custom_call.1} parent=1 // pred_fallthru
      _
    // Predicated region
    $region38: #{tpu_custom_call.1} parent=1 // pred_check
      _
    $region39: #{tpu_custom_call.1} parent=1 // pred_check_branch
      %105 = sbr.rel (0) target = $region41
    $region40: #{tpu_custom_call.1} parent=1 // pred_region
      %107 = dma.done [#allocation9], 512
    $region41: #{tpu_custom_call.1} parent=1 // pred_fallthru
      _
    // Predicated region
    $region42: #{tpu_custom_call.1} parent=1 // pred_check
      _
    $region43: #{tpu_custom_call.1} parent=1 // pred_check_branch
      %109 = sbr.rel (0) target = $region45
    $region44: #{tpu_custom_call.1} parent=1 // pred_region
      %111 = dma.done [#allocation9], 512
    $region45: #{tpu_custom_call.1} parent=1 // pred_fallthru
      _
    // Predicated region
    $region46: #{tpu_custom_call.1} parent=1 // pred_check
      _
    $region47: #{tpu_custom_call.1} parent=1 // pred_check_branch
      %113 = sbr.rel (0) target = $region49
    $region48: #{tpu_custom_call.1} parent=1 // pred_region
      %115 = dma.done [#allocation12], 512
    $region49: #{tpu_custom_call.1} parent=1 // pred_fallthru
      _
    %v116 = vld [vmem:[#allocation2] sm:$0xff]
    %v117 = vld [vmem:[#allocation2 + $0x8] sm:$0xff]
    %v118 = vld [vmem:[#allocation7] sm:$0xff]
    %v119 = vld [vmem:[#allocation7 + $0x8] sm:$0xff]
    %v120 = vld [vmem:[#allocation7 + $0x10] sm:$0xff]
    %v121 = vld [vmem:[#allocation7 + $0x18] sm:$0xff]
    %vm122 = vcmask 261120
    %v124 = vsel %vm122, %v116, 0
    %v127 = vsel %vm122, %v117, 0
    %129 = vmatpush.msra.mxu0 0.0
    %130 = vmatpush.msra.mxu0 0.0
    %131 = vmatpush.msra.mxu0 0.0
    %132 = vmatpush.msra.mxu0 0.0
    %133 = vmatpush.msra.mxu0 0.0
    %134 = vmatpush.msra.mxu0 0.0
    %135 = vmatpush.msra.mxu0 0.0
    %136 = vmatpush.msra.mxu0 0.0
    %137 = vmatpush.msra.mxu0 0.0
    %138 = vmatpush.msra.mxu0 0.0
    %139 = vmatpush.msra.mxu0 0.0
    %140 = vmatpush.msra.mxu0 0.0
    %141 = vmatpush.msra.mxu0 %v121
    %142 = vmatpush.msra.mxu0 %v120
    %143 = vmatpush.msra.mxu0 %v119
    %144 = vmatpush.msra.mxu0 %v118
    %145 = vmatmul.f32.gmra.mxu0 %v124
    %v146 = vpop.f32.mrf.mxu0
    %v147 = vadd.f32 0.0, %v146
    %148 = vmatmul.f32.gmra.mxu0 %v127
    %v149 = vpop.f32.mrf.mxu0
    %v150 = vadd.f32 0.0, %v149
    %151 = vdwg.mxu0
    %v152 = vld [vmem:[#allocation8] sm:$0xff]
    %v153 = vld [vmem:[#allocation8 + $0x8] sm:$0xff]
    %v154 = vld [vmem:[#allocation8 + $0x10] sm:$0xff]
    %v155 = vld [vmem:[#allocation8 + $0x18] sm:$0xff]
    %156 = vmatpush.msra.mxu0 0.0
    %157 = vmatpush.msra.mxu0 0.0
    %158 = vmatpush.msra.mxu0 0.0
    %159 = vmatpush.msra.mxu0 0.0
    %160 = vmatpush.msra.mxu0 0.0
    %161 = vmatpush.msra.mxu0 0.0
    %162 = vmatpush.msra.mxu0 0.0
    %163 = vmatpush.msra.mxu0 0.0
    %164 = vmatpush.msra.mxu0 0.0
    %165 = vmatpush.msra.mxu0 0.0
    %166 = vmatpush.msra.mxu0 0.0
    %167 = vmatpush.msra.mxu0 0.0
    %168 = vmatpush.msra.mxu0 %v155
    %169 = vmatpush.msra.mxu0 %v154
    %170 = vmatpush.msra.mxu0 %v153
    %171 = vmatpush.msra.mxu0 %v152
    %172 = vmatmul.f32.gmra.mxu0 %v124
    %v173 = vpop.f32.mrf.mxu0
    %v174 = vadd.f32 0.0, %v173
    %175 = vmatmul.f32.gmra.mxu0 %v127
    %v176 = vpop.f32.mrf.mxu0
    %v177 = vadd.f32 0.0, %v176
    %178 = vdwg.mxu0
    %v179 = vld [vmem:[#allocation5] sm:$0x3]
    %v180 = vld [vmem:[#allocation10] sm:$0xff]
    %v181 = vld [vmem:[#allocation10 + $0x8] sm:$0xff]
    %v182 = vld [vmem:[#allocation10 + $0x10] sm:$0xff]
    %v183 = vld [vmem:[#allocation10 + $0x18] sm:$0xff]
    %v185 = vsel %vm122, %v179, 0
    %187 = vmatpush.msra.mxu0 0.0
    %188 = vmatpush.msra.mxu0 0.0
    %189 = vmatpush.msra.mxu0 0.0
    %190 = vmatpush.msra.mxu0 0.0
    %191 = vmatpush.msra.mxu0 0.0
    %192 = vmatpush.msra.mxu0 0.0
    %193 = vmatpush.msra.mxu0 0.0
    %194 = vmatpush.msra.mxu0 0.0
    %195 = vmatpush.msra.mxu0 0.0
    %196 = vmatpush.msra.mxu0 0.0
    %197 = vmatpush.msra.mxu0 0.0
    %198 = vmatpush.msra.mxu0 0.0
    %199 = vmatpush.msra.mxu0 %v183
    %200 = vmatpush.msra.mxu0 %v182
    %201 = vmatpush.msra.mxu0 %v181
    %202 = vmatpush.msra.mxu0 %v180
    %203 = vmatmul.f32.gmra.mxu0 %v185
    %v204 = vpop.f32.mrf.mxu0
    %v205 = vadd.f32 0.0, %v204
    %206 = vdwg.mxu0
    %v207 = vmul.f32 %v205, 0.35355338
    %v209 = vrot.slane %v207, 1
    %v210 = vperm.slane %v207, 0
    %v211 = vperm.slane %v209, 0
    %v214 = vmul.f32 %v210, %v147
    %v215 = vmul.f32 %v211, %v150
    %v216 = vld [vmem:[#allocation11] sm:$0xff]
    %v217 = vld [vmem:[#allocation11 + $0x8] sm:$0xff]
    %v218 = vld [vmem:[#allocation11 + $0x10] sm:$0xff]
    %v219 = vld [vmem:[#allocation11 + $0x18] sm:$0xff]
    %v221 = vsel %vm122, %v214, 0
    %v224 = vsel %vm122, %v215, 0
    %226 = vmatpush.msra.mxu0 0.0
    %227 = vmatpush.msra.mxu0 0.0
    %228 = vmatpush.msra.mxu0 0.0
    %229 = vmatpush.msra.mxu0 0.0
    %230 = vmatpush.msra.mxu0 0.0
    %231 = vmatpush.msra.mxu0 0.0
    %232 = vmatpush.msra.mxu0 0.0
    %233 = vmatpush.msra.mxu0 0.0
    %234 = vmatpush.msra.mxu0 0.0
    %235 = vmatpush.msra.mxu0 0.0
    %236 = vmatpush.msra.mxu0 0.0
    %237 = vmatpush.msra.mxu0 0.0
    %238 = vmatpush.msra.mxu0 %v219
    %239 = vmatpush.msra.mxu0 %v218
    %240 = vmatpush.msra.mxu0 %v217
    %241 = vmatpush.msra.mxu0 %v216
    %242 = vmatmul.f32.gmra.mxu0 %v221
    %v243 = vpop.f32.mrf.mxu0
    %v244 = vadd.f32 0.0, %v243
    %245 = vmatmul.f32.gmra.mxu0 %v224
    %v246 = vpop.f32.mrf.mxu0
    %v247 = vadd.f32 0.0, %v246
    %248 = vdwg.mxu0
    %v249 = vsel %vm122, %v244, -inf
    %v250 = vsel %vm122, %v247, -inf
    %v251 = vmax.f32 %v249, %v250
    %v252 = vrot.slane %v251, 4
    %v253 = vmax.f32 %v251, %v252
    %v254 = vrot.slane %v253, 2
    %v255 = vmax.f32 %v253, %v254
    %v256 = vrot.slane %v255, 1
    %v257 = vmax.f32 %v255, %v256
    %v258 = vsub.f32 %v244, %v257
    %v259 = vsub.f32 %v247, %v257
    %v260 = vmul.f32 %v258, 1.442695
    %v261 = vpow.pop %v260
    %v262 = vmul.f32 %v259, 1.442695
    %v263 = vpow.pop %v262
    %v264 = vmul.f32 %v261, %v174
    %v265 = vmul.f32 %v263, %v177
    %v266 = vsel %vm122, %v264, 0.0
    %v267 = vrot.slane %v266, 4
    %v268 = vadd.f32 %v266, %v267
    %v269 = vrot.slane %v268, 2
    %v270 = vadd.f32 %v268, %v269
    %v271 = vrot.slane %v270, 1
    %v272 = vadd.f32 %v270, %v271
    %v273 = vsel %vm122, %v265, 0.0
    %v274 = vrot.slane %v273, 4
    %v275 = vadd.f32 %v273, %v274
    %v276 = vrot.slane %v275, 2
    %v277 = vadd.f32 %v275, %v276
    %v278 = vrot.slane %v277, 1
    %v279 = vadd.f32 %v277, %v278
    %v280 = vsel %vm122, %v261, 0.0
    %v281 = vrot.slane %v280, 4
    %v282 = vadd.f32 %v280, %v281
    %v283 = vrot.slane %v282, 2
    %v284 = vadd.f32 %v282, %v283
    %v285 = vrot.slane %v284, 1
    %v286 = vadd.f32 %v284, %v285
    %v287 = vsel %vm122, %v263, 0.0
    %v288 = vrot.slane %v287, 4
    %v289 = vadd.f32 %v287, %v288
    %v290 = vrot.slane %v289, 2
    %v291 = vadd.f32 %v289, %v290
    %v292 = vrot.slane %v291, 1
    %v293 = vadd.f32 %v291, %v292
    %v294 = vsel %vm122, %v174, 0.0
    %v295 = vrot.slane %v294, 4
    %v296 = vadd.f32 %v294, %v295
    %v297 = vrot.slane %v296, 2
    %v298 = vadd.f32 %v296, %v297
    %v299 = vrot.slane %v298, 1
    %v300 = vadd.f32 %v298, %v299
    %v301 = vsel %vm122, %v177, 0.0
    %v302 = vrot.slane %v301, 4
    %v303 = vadd.f32 %v301, %v302
    %v304 = vrot.slane %v303, 2
    %v305 = vadd.f32 %v303, %v304
    %v306 = vrot.slane %v305, 1
    %v307 = vadd.f32 %v305, %v306
    %vm310 = vcmask 1041409
    %v311 = vsel %vm310, %v279, %v272
    %v315 = vsel %vm310, %v293, %v286
    %316 = vrot.lane.b32.xlu0 %v315, 32
    %v317 = vpop.permute.xlu0 %316
    %v321 = vsel %vm310, %v307, %v300
    %322 = vrot.lane.b32.xlu0 %v321, 64
    %v323 = vpop.permute.xlu0 %322
    %326 = vrot.lane.b32.xlu0 %v257, 96
    %v327 = vpop.permute.xlu0 %326
    %v329 = vsel %vm122, %v311, %v317
    %vm330 = vcmask 523264
    %v331 = vsel %vm330, %v329, %v323
    %vm332 = vcmask 785408
    %v333 = vsel %vm332, %v331, %v327
    %334 = vst [vmem:[#allocation13] sm:$0x3] %v333
    // Predicated region
    $region50: #{tpu_custom_call.1} parent=1 // pred_check
      _
    $region51: #{tpu_custom_call.1} parent=1 // pred_check_branch
      %336 = sbr.rel (0) target = $region53
    $region52: #{tpu_custom_call.1} parent=1 // pred_region
      %338 = vsyncadd [#allocation4], 0
      %s340 = sshll.u32 [#allocation13], 4
      %s341 = int_to_ptr.vmem [resolvable:$true] %s340
      %s342 = sshll.u32 %s6, 4
      %s343 = int_to_ptr.hbm [resolvable:$true] %s342
      %345 = dma.vmem_to_hbm [thread:$0]  %s341, 32, %s343, [#allocation4]
    $region53: #{tpu_custom_call.1} parent=1 // pred_fallthru
      _
    // Predicated region
    $region54: #{tpu_custom_call.1} parent=1 // pred_check
      _
    $region55: #{tpu_custom_call.1} parent=1 // pred_check_branch
      %347 = sbr.rel (0) target = $region57
    $region56: #{tpu_custom_call.1} parent=1 // pred_region
      %349 = dma.done [#allocation4], 32
    $region57: #{tpu_custom_call.1} parent=1 // pred_fallthru
      _
    %350 = vsyncpa [#allocation3], 1
    %351 = vsyncpa [#allocation6], 1
    %352 = vsyncpa [#allocation9], 1
    %353 = vsyncpa [#allocation12], 1
    %354 = vsyncpa [#allocation4], 1

</llo_original>
